<compile_context>
chip_gen: v7x
topology: tpu7x:2x2x1
jax: 0.10.0
libtpu: 0.0.40
codegen_flags: <defaults>
</compile_context>

<pallas_src>
import jax
import jax.numpy as jnp
from jax.experimental import pallas as pl
from jax.experimental.pallas import tpu as pltpu


# ----------------------------------------------------------------------------
# Kernel: out = scale * x   (scale is a single scalar parameter held in SMEM)
# ----------------------------------------------------------------------------
def _scale_kernel(s_ref, x_ref, o_ref):
    s = s_ref[0]                                  # scalar read from SMEM
    o_ref[...] = (x_ref[...] * s).astype(o_ref.dtype)


def _compiler_params():
    kwargs = {"dimension_semantics": ("parallel",)}
    try:
        cap = int(pltpu.get_tpu_info().vmem_capacity_bytes)
        if cap > 0:
            # 3/4 of physical VMEM, capped at 96 MiB: ~96 MiB on v5e/v6e
            # (128 MiB chips), ~48 MiB on v7x (64 MiB/TC).
            kwargs["vmem_limit_bytes"] = int(min((cap * 3) // 4, 96 * 1024 * 1024))
    except Exception:
        pass                                      # leave the compiler default
    return pltpu.CompilerParams(**kwargs)


def scale_forward(x, scale):
    """Scale.forward: elementwise `scale * x` (scale is a (1,) parameter)."""
    orig_shape = x.shape
    out_dtype = jnp.result_type(x.dtype, jnp.float32)
    total = int(x.size)

    # --- lane-dense flattening ------------------------------------------------
    # Prefer a (rows, lanes) view with lanes a multiple of 128 and rows >= 8:
    # unmasked full-lane stores + fully packed sublanes.
    divisors = [w for w in (1024, 512, 256, 128) if total % w == 0]
    if divisors:
        wide = [w for w in divisors if total // w >= 8]
        lanes = wide[0] if wide else divisors[-1]
    else:
        # ragged fallback: keep the natural trailing dim; the block spans it
        # fully so the (8,128) rule is satisfied by "equals full array dim".
        lanes = int(orig_shape[-1]) if x.ndim >= 1 else 1
        lanes = max(lanes, 1)
    M = total // lanes
    xm = x.reshape(M, lanes)

    # --- row tiling -------------------------------------------------------------
    # ~4 MiB blocks (multiple-of-8 rows); mem-bound elementwise hits ~86% of the
    # HBM roofline at this size.  Single tile if the whole slab fits; ragged last
    # tile handled by pl.cdiv -> no explicit pad / slice passes over HBM.
    bytes_per_row = lanes * jnp.dtype(out_dtype).itemsize
    tm_cap = max(8, (4 * 1024 * 1024 // max(bytes_per_row, 1)) // 8 * 8)
    TM = M if M <= tm_cap else tm_cap
    grid = (pl.cdiv(M, TM),)

    # nn.Parameter(torch.tensor([init_val])) -> (1,) f32 scalar in SMEM
    s = jnp.asarray(scale, jnp.float32).reshape(-1)[:1]

    out = pl.pallas_call(
        _scale_kernel,
        out_shape=jax.ShapeDtypeStruct((M, lanes), out_dtype),
        grid=grid,
        in_specs=[
            pl.BlockSpec(memory_space=pltpu.MemorySpace.SMEM),   # scale param
            pl.BlockSpec((TM, lanes), lambda i: (i, 0)),          # x tile
        ],
        out_specs=pl.BlockSpec((TM, lanes), lambda i: (i, 0)),
        compiler_params=_compiler_params(),
    )(s, xm)
    return out.reshape(orig_shape)


# ----------------------------------------------------------------------------
# Demo / self-check
# ----------------------------------------------------------------------------
if __name__ == "__main__":
    key = jax.random.PRNGKey(0)
    kx, ky = jax.random.split(key)

    # Scale(init_val=0.5) applied to an FCOS-style bbox regression map (NCHW).
    init_val = 0.5
    scale_param = jnp.full((1,), init_val, jnp.float32)     # nn.Parameter([0.5])

    x = jax.random.normal(kx, (2, 4, 16, 16), jnp.float32)
    out = scale_forward(x, scale_param)
    jax.block_until_ready(out)

    ref = scale_param[0] * x                                 # pure-JAX reference
    assert out.shape == x.shape
    assert bool(jnp.all(jnp.isfinite(out)))
    assert bool(jnp.allclose(out, ref, rtol=1e-6, atol=1e-6))

    # Exercise the ragged (non-128-divisible) fallback path once as well.
    y = jax.random.normal(ky, (2, 3, 7, 9), jnp.float32)
    out2 = scale_forward(y, jnp.full((1,), 1.25, jnp.float32))
    jax.block_until_ready(out2)
    assert bool(jnp.allclose(out2, 1.25 * y, rtol=1e-6, atol=1e-6))

    print("KERNEL_OK")
</pallas_src>

<mosaic_0001>
module attributes {stable_mosaic.version = 11 : i64} {
  func.func @_scale_kernel(%arg0: i32, %arg1: memref<1xf32, #tpu.memory_space<smem>>, %arg2: memref<8x256xf32, #tpu.memory_space<vmem>>, %arg3: memref<8x256xf32, #tpu.memory_space<vmem>>) attributes {dimension_semantics = [#tpu.dimension_semantics<parallel>], iteration_bounds = array<i64: 1>, scalar_prefetch = 0 : i64, scratch_operands = 0 : i64, tpu.core_type = #tpu.core_type<tc>, window_params = [{transform_indices = @transform_0, window_bounds = array<i64: 1>}, {transform_indices = @transform_1, window_bounds = array<i64: 8, 256>}, {transform_indices = @transform_2, window_bounds = array<i64: 8, 256>}]} {
    %c0 = arith.constant 0 : index
    %0 = memref.load %arg1[%c0] : memref<1xf32, #tpu.memory_space<smem>>
    %c0_0 = arith.constant 0 : index
    %c0_1 = arith.constant 0 : index
    %1 = vector.load %arg2[%c0_0, %c0_1] : memref<8x256xf32, #tpu.memory_space<vmem>>, vector<8x256xf32>
    %2 = vector.broadcast %0 : f32 to vector<8x256xf32>
    %3 = arith.mulf %1, %2 : vector<8x256xf32>
    %c0_2 = arith.constant 0 : index
    %c0_3 = arith.constant 0 : index
    %4 = vector.load %arg3[%c0_2, %c0_3] : memref<8x256xf32, #tpu.memory_space<vmem>>, vector<8x256xf32>
    tpu.vector_store %arg3[%c0_2, %c0_3], %3 {strides = array<i32>} : memref<8x256xf32, #tpu.memory_space<vmem>>, vector<8x256xf32>,
    return
  }
  func.func @transform_0(%arg0: i32) -> i32 {
    %c0_i32 = arith.constant 0 : i32
    %c0_i32_0 = arith.constant 0 : i32
    return %c0_i32 : i32
  }
  func.func @transform_1(%arg0: i32) -> (i32, i32) {
    %c0_i32 = arith.constant 0 : i32
    %c0_i32_0 = arith.constant 0 : i32
    return %arg0, %c0_i32 : i32, i32
  }
  func.func @transform_2(%arg0: i32) -> (i32, i32) {
    %c0_i32 = arith.constant 0 : i32
    %c0_i32_0 = arith.constant 0 : i32
    return %arg0, %c0_i32 : i32, i32
  }
}

</mosaic_0001>

<llo_original>
// kernel: tpu_custom_call.1
$region0: #{tpu_custom_call.1}
  #allocation0 [shape = 'u32[]', space=smem, size = 0x4, offset = 0x4, fixed_abs, tag = 'smem constant byte address 0x4 - core index']
  #allocation1 [shape = 'u32[144,128]{1,0:T(1,128)}', space=vmem, size = 0x12000, scoped, tag = 'internal scratch']
  #allocation2 [shape = 'f32[1]{0:T(128)S(6)}', space=smem, size = 0x200, scoped, tag = 'scoped memory for tpu_custom_call.1']
  %s0 = inlined_call_operand.<no memory space> [shape: f32[1], index: 0, kind: input, shape index: {}]
  %s1 = inlined_call_operand.hbm [shape: f32[8,256], index: 1, kind: input, shape index: {}]
  %s2 = inlined_call_operand.hbm [shape: f32[8,256], index: 2, kind: output, shape index: {}]
  %s3 = sld [smem:[#allocation0]]
  $region22: #{tpu_custom_call.1} parent=0
    _
  %s5 = ssub.s32 1, %s3
  %s6 = scalar_select 0, %s5, %s3
  %7 = sst [smem:[#allocation2]] %s0
  $region1: #{tpu_custom_call.1} parent=0
    #allocation3 [shape = 'u8[8192]{0}', space=vmem, size = 0x2000, scoped, tag = 'input window, operand 1, single buffered']
    #allocation4 [shape = 's32[1]{0}', space=sflag, size = 0x4, scoped, tag = 'scoped memory for tpu_custom_call.1']
    #allocation5 [shape = 's32[1]{0}', space=sflag, size = 0x4, scoped, tag = 'scoped memory for tpu_custom_call.1']
    #allocation6 [shape = 'u8[8192]{0}', space=vmem, size = 0x2000, scoped, tag = 'output window, operand 0, single buffered']
    %8 = vsyncpa [#allocation4], 0
    %9 = vsyncpa [#allocation5], 0
    // Predicated region
    $region2: #{tpu_custom_call.1} parent=1 // pred_check
      _
    $region3: #{tpu_custom_call.1} parent=1 // pred_check_branch
      %11 = sbr.rel (0) target = $region5
    $region4: #{tpu_custom_call.1} parent=1 // pred_region
      _
    $region5: #{tpu_custom_call.1} parent=1 // pred_fallthru
      _
    // Predicated region
    $region6: #{tpu_custom_call.1} parent=1 // pred_check
      _
    $region7: #{tpu_custom_call.1} parent=1 // pred_check_branch
      %13 = sbr.rel (0) target = $region9
    $region8: #{tpu_custom_call.1} parent=1 // pred_region
      %s15 = ssub.s32 256, 256
      %16 = vsyncadd [#allocation4], %s15
      %s18 = sshll.u32 [#allocation3], 4
      %s19 = int_to_ptr.vmem [resolvable:$true] %s18
      %21 = dma.hbm_to_vmem [thread:$0]  %s1, 256, %s19, [#allocation4]
    $region9: #{tpu_custom_call.1} parent=1 // pred_fallthru
      _
    // Predicated region
    $region10: #{tpu_custom_call.1} parent=1 // pred_check
      _
    $region11: #{tpu_custom_call.1} parent=1 // pred_check_branch
      %23 = sbr.rel (0) target = $region13
    $region12: #{tpu_custom_call.1} parent=1 // pred_region
      %24 = dma.done [#allocation4], 256
    $region13: #{tpu_custom_call.1} parent=1 // pred_fallthru
      _
    %s25 = sld [smem:[#allocation2]]
    %v26 = vld [vmem:[#allocation3] sm:$0xff]
    %v27 = vld [vmem:[#allocation3 + $0x8] sm:$0xff]
    %v28 = vstv %s25
    %v29 = vmul.f32 %v26, %v28
    %v30 = vmul.f32 %v27, %v28
    %31 = vst [vmem:[#allocation6] sm:$0xff] %v29
    %32 = vst [vmem:[#allocation6 + $0x8] sm:$0xff] %v30
    // Predicated region
    $region14: #{tpu_custom_call.1} parent=1 // pred_check
      _
    $region15: #{tpu_custom_call.1} parent=1 // pred_check_branch
      %34 = sbr.rel (0) target = $region17
    $region16: #{tpu_custom_call.1} parent=1 // pred_region
      %s36 = ssub.s32 256, 256
      %37 = vsyncadd [#allocation5], %s36
      %s39 = sshll.u32 [#allocation6], 4
      %s40 = int_to_ptr.vmem [resolvable:$true] %s39
      %42 = dma.vmem_to_hbm [thread:$0]  %s40, 256, %s2, [#allocation5]
    $region17: #{tpu_custom_call.1} parent=1 // pred_fallthru
      _
    // Predicated region
    $region18: #{tpu_custom_call.1} parent=1 // pred_check
      _
    $region19: #{tpu_custom_call.1} parent=1 // pred_check_branch
      %44 = sbr.rel (0) target = $region21
    $region20: #{tpu_custom_call.1} parent=1 // pred_region
      %45 = dma.done [#allocation5], 256
    $region21: #{tpu_custom_call.1} parent=1 // pred_fallthru
      _
    %46 = vsyncpa [#allocation4], 1
    %47 = vsyncpa [#allocation5], 1

</llo_original>
